<compile_context>
chip_gen: v7x
topology: tpu7x:2x2x1
jax: 0.10.0
libtpu: 0.0.40
codegen_flags: <defaults>
</compile_context>

<pallas_src>
import math

import jax
import jax.numpy as jnp
from jax.experimental import pallas as pl
from jax.experimental.pallas import tpu as pltpu

N_STATES = 12
N_ACTIONS = 12
HIDDEN = 200

# Lane-dense padded feature dims (multiples of 128).
IN_PAD = 128
HIDDEN_PAD = 256
OUT_PAD = 128


def _round_up(n, m):
    return ((n + m - 1) // m) * m


def _mlp_kernel(x_ref, w1_ref, b1_ref, w2_ref, b2_ref, w3_ref, b3_ref,
                o_ref, xpad_ref):
    # x_ref: [TB, N_STATES] f32 (only the useful 48 B/row came over HBM).
    # Zero-extend to IN_PAD lanes in VMEM scratch; the zero lanes multiply
    # zero rows of w1, so the result is exact.  Re-zero every step so no
    # cross-step / cross-core scratch state is assumed.
    xpad_ref[...] = jnp.zeros_like(xpad_ref)
    xpad_ref[:, :N_STATES] = x_ref[...]
    x = xpad_ref[...].astype(jnp.bfloat16)

    # Three MXU passes, f32 accumulation; ReLU on the VPU in f32, then cast
    # back to bf16 to feed the next MXU pass.
    h1 = jnp.dot(x, w1_ref[...], preferred_element_type=jnp.float32) + b1_ref[...]
    h1 = jnp.maximum(h1, 0.0).astype(jnp.bfloat16)
    h2 = jnp.dot(h1, w2_ref[...], preferred_element_type=jnp.float32) + b2_ref[...]
    h2 = jnp.maximum(h2, 0.0).astype(jnp.bfloat16)
    out = jnp.dot(h2, w3_ref[...], preferred_element_type=jnp.float32) + b3_ref[...]
    o_ref[...] = out.astype(o_ref.dtype)


def net_forward(x, params):
    """Pallas forward pass of Net. x: [B, N_STATES] f32 -> [B, N_ACTIONS] f32."""
    w1, b1, w2, b2, w3, b3 = params  # padded; weights bf16, biases f32
    B = x.shape[0]

    # Batch tile: single step for small/medium batches (rounded to the bf16
    # sublane tile of 16); 512 rows per step for large batches, which keeps
    # per-step work large and grid >= 2 (both v7x TensorCores active).
    if B <= 512:
        TB = _round_up(max(B, 1), 16)
    else:
        TB = 512
    B_pad = _round_up(B, TB)

    xp = x.astype(jnp.float32)
    if B_pad != B:
        xp = jnp.pad(xp, ((0, B_pad - B), (0, 0)))  # tiny: 48 B/row

    const = lambda i: (0, 0)  # weights/biases stay VMEM-resident across steps
    out_pad = pl.pallas_call(
        _mlp_kernel,
        out_shape=jax.ShapeDtypeStruct((B_pad, OUT_PAD), jnp.bfloat16),
        grid_spec=pltpu.PrefetchScalarGridSpec(
            num_scalar_prefetch=0,
            grid=(B_pad // TB,),
            in_specs=[
                pl.BlockSpec((TB, N_STATES), lambda i: (i, 0)),     # x (unpadded lanes)
                pl.BlockSpec((IN_PAD, HIDDEN_PAD), const),          # w1
                pl.BlockSpec((1, HIDDEN_PAD), const),               # b1
                pl.BlockSpec((HIDDEN_PAD, HIDDEN_PAD), const),      # w2
                pl.BlockSpec((1, HIDDEN_PAD), const),               # b2
                pl.BlockSpec((HIDDEN_PAD, OUT_PAD), const),         # w3
                pl.BlockSpec((1, OUT_PAD), const),                  # b3
            ],
            out_specs=pl.BlockSpec((TB, OUT_PAD), lambda i: (i, 0)),
            scratch_shapes=[pltpu.VMEM((TB, IN_PAD), jnp.float32)],
        ),
        compiler_params=pltpu.CompilerParams(
            dimension_semantics=("parallel",)),
    )(xp, w1, b1, w2, b2, w3, b3)

    # Strip batch / lane padding and hand back f32 Q-values.
    return out_pad[:B, :N_ACTIONS].astype(jnp.float32)


def init_params_f32(key):
    """Init matching nn.Linear + weight.data.normal_(0, 0.1), unpadded f32.

    PyTorch Linear stores weight as [out, in]; we store the transpose
    [in, out] so the kernel computes x @ W.
    """
    ks = jax.random.split(key, 6)

    def linear(kw, kb, fan_in, fan_out):
        w = 0.1 * jax.random.normal(kw, (fan_in, fan_out), dtype=jnp.float32)
        bound = 1.0 / math.sqrt(fan_in)
        b = jax.random.uniform(kb, (1, fan_out), jnp.float32, -bound, bound)
        return w, b

    w1, b1 = linear(ks[0], ks[1], N_STATES, HIDDEN)
    w2, b2 = linear(ks[2], ks[3], HIDDEN, HIDDEN)
    w3, b3 = linear(ks[4], ks[5], HIDDEN, N_ACTIONS)
    return (w1, b1, w2, b2, w3, b3)


def pad_params(raw):
    """Zero-pad weights/biases to lane-dense sizes; weights -> bf16, biases f32."""
    w1, b1, w2, b2, w3, b3 = raw

    def padw(w, rp, cp):
        out = jnp.zeros((rp, cp), jnp.float32).at[:w.shape[0], :w.shape[1]].set(w)
        return out.astype(jnp.bfloat16)

    def padb(b, cp):
        return jnp.zeros((1, cp), jnp.float32).at[:, :b.shape[1]].set(b)

    return (padw(w1, IN_PAD, HIDDEN_PAD), padb(b1, HIDDEN_PAD),
            padw(w2, HIDDEN_PAD, HIDDEN_PAD), padb(b2, HIDDEN_PAD),
            padw(w3, HIDDEN_PAD, OUT_PAD), padb(b3, OUT_PAD))


def net_forward_ref_f32(x, raw_params):
    """Pure-f32 reference of the original PyTorch forward (loose tolerance)."""
    w1, b1, w2, b2, w3, b3 = raw_params
    h1 = jnp.maximum(x @ w1 + b1, 0.0)
    h2 = jnp.maximum(h1 @ w2 + b2, 0.0)
    return h2 @ w3 + b3


def net_forward_ref_bf16(x, padded_params):
    """Plain-JAX reference applying the same bf16/padding scheme (tight tol)."""
    w1, b1, w2, b2, w3, b3 = padded_params
    B = x.shape[0]
    xb = jnp.zeros((B, IN_PAD), jnp.bfloat16).at[:, :N_STATES].set(
        x.astype(jnp.bfloat16))
    h1 = jnp.maximum(
        jnp.dot(xb, w1, preferred_element_type=jnp.float32) + b1, 0.0
    ).astype(jnp.bfloat16)
    h2 = jnp.maximum(
        jnp.dot(h1, w2, preferred_element_type=jnp.float32) + b2, 0.0
    ).astype(jnp.bfloat16)
    out = jnp.dot(h2, w3, preferred_element_type=jnp.float32) + b3
    return out[:, :N_ACTIONS].astype(jnp.bfloat16).astype(jnp.float32)


if __name__ == "__main__":
    key = jax.random.PRNGKey(0)
    kx, kp, kx2 = jax.random.split(key, 3)

    raw = init_params_f32(kp)
    params = pad_params(raw)

    # Small DQN-style batch (single grid step path).
    B = 4
    x = jax.random.normal(kx, (B, N_STATES), dtype=jnp.float32)
    out = jax.block_until_ready(net_forward(x, params))
    assert out.shape == (B, N_ACTIONS)
    ref_bf = net_forward_ref_bf16(x, params)
    ref_32 = net_forward_ref_f32(x, raw)
    assert jnp.allclose(out, ref_bf, atol=3e-2, rtol=3e-2), "mismatch vs bf16 ref"
    assert jnp.allclose(out, ref_32, atol=1e-1, rtol=1e-1), "mismatch vs f32 ref"

    # Larger batch exercising TB=512 with grid >= 2 (both v7x TCs).
    B2 = 600
    x2 = jax.random.normal(kx2, (B2, N_STATES), dtype=jnp.float32)
    out2 = jax.block_until_ready(net_forward(x2, params))
    assert out2.shape == (B2, N_ACTIONS)
    ref2_32 = net_forward_ref_f32(x2, raw)
    assert jnp.allclose(out2, ref2_32, atol=1e-1, rtol=1e-1), "mismatch vs f32 ref (B=600)"

    print("KERNEL_OK")
</pallas_src>

<mosaic_0001>
module attributes {stable_mosaic.version = 11 : i64} {
  func.func @_mlp_kernel(%arg0: i32, %arg1: memref<16x12xf32, #tpu.memory_space<vmem>>, %arg2: memref<128x256xbf16, #tpu.memory_space<vmem>>, %arg3: memref<1x256xf32, #tpu.memory_space<vmem>>, %arg4: memref<256x256xbf16, #tpu.memory_space<vmem>>, %arg5: memref<1x256xf32, #tpu.memory_space<vmem>>, %arg6: memref<256x128xbf16, #tpu.memory_space<vmem>>, %arg7: memref<1x128xf32, #tpu.memory_space<vmem>>, %arg8: memref<16x128xbf16, #tpu.memory_space<vmem>>, %arg9: memref<16x128xf32, #tpu.memory_space<vmem>>) attributes {dimension_semantics = [#tpu.dimension_semantics<parallel>], iteration_bounds = array<i64: 1>, scalar_prefetch = 0 : i64, scratch_operands = 1 : i64, tpu.core_type = #tpu.core_type<tc>, window_params = [{transform_indices = @transform_0, window_bounds = array<i64: 16, 12>}, {pipeline_mode = #tpu.pipeline_mode<synchronous>, transform_indices = @transform_1, window_bounds = array<i64: 128, 256>}, {pipeline_mode = #tpu.pipeline_mode<synchronous>, transform_indices = @transform_2, window_bounds = array<i64: 1, 256>}, {pipeline_mode = #tpu.pipeline_mode<synchronous>, transform_indices = @transform_3, window_bounds = array<i64: 256, 256>}, {pipeline_mode = #tpu.pipeline_mode<synchronous>, transform_indices = @transform_4, window_bounds = array<i64: 1, 256>}, {pipeline_mode = #tpu.pipeline_mode<synchronous>, transform_indices = @transform_5, window_bounds = array<i64: 256, 128>}, {pipeline_mode = #tpu.pipeline_mode<synchronous>, transform_indices = @transform_6, window_bounds = array<i64: 1, 128>}, {transform_indices = @transform_7, window_bounds = array<i64: 16, 128>}]} {
    %cst = arith.constant 0.000000e+00 : f32
    %0 = vector.broadcast %cst : f32 to vector<16x128xf32>
    %c0 = arith.constant 0 : index
    %c0_0 = arith.constant 0 : index
    %1 = vector.load %arg9[%c0, %c0_0] : memref<16x128xf32, #tpu.memory_space<vmem>>, vector<16x128xf32>
    tpu.vector_store %arg9[%c0, %c0_0], %0 {strides = array<i32>} : memref<16x128xf32, #tpu.memory_space<vmem>>, vector<16x128xf32>,
    %c0_1 = arith.constant 0 : index
    %c0_2 = arith.constant 0 : index
    %2 = vector.load %arg1[%c0_1, %c0_2] : memref<16x12xf32, #tpu.memory_space<vmem>>, vector<16x12xf32>
    %c0_3 = arith.constant 0 : index
    %c0_4 = arith.constant 0 : index
    %3 = vector.load %arg9[%c0_3, %c0_4] : memref<16x128xf32, #tpu.memory_space<vmem>>, vector<16x12xf32>
    tpu.vector_store %arg9[%c0_3, %c0_4], %2 {strides = array<i32>} : memref<16x128xf32, #tpu.memory_space<vmem>>, vector<16x12xf32>,
    %c0_5 = arith.constant 0 : index
    %c0_6 = arith.constant 0 : index
    %4 = vector.load %arg9[%c0_5, %c0_6] : memref<16x128xf32, #tpu.memory_space<vmem>>, vector<16x128xf32>
    %5 = arith.truncf %4 : vector<16x128xf32> to vector<16x128xbf16>
    %c0_7 = arith.constant 0 : index
    %c0_8 = arith.constant 0 : index
    %6 = vector.load %arg2[%c0_7, %c0_8] : memref<128x256xbf16, #tpu.memory_space<vmem>>, vector<128x256xbf16>
    %cst_9 = arith.constant dense<0.000000e+00> : vector<16x256xf32>
    %7 = tpu.matmul %5, %6, %cst_9 {dimension_numbers = #tpu.dot_dimension_numbers<[1], [0], [0], [1], [0, 0, 1, 1], [], []>} : vector<16x128xbf16>, vector<128x256xbf16>, vector<16x256xf32> -> vector<16x256xf32>
    %c0_10 = arith.constant 0 : index
    %c0_11 = arith.constant 0 : index
    %8 = vector.load %arg3[%c0_10, %c0_11] : memref<1x256xf32, #tpu.memory_space<vmem>>, vector<1x256xf32>
    %9 = vector.broadcast %8 : vector<1x256xf32> to vector<16x256xf32>
    %10 = arith.addf %7, %9 : vector<16x256xf32>
    %cst_12 = arith.constant 0.000000e+00 : f32
    %11 = vector.broadcast %cst_12 : f32 to vector<16x256xf32>
    %12 = arith.maximumf %10, %11 : vector<16x256xf32>
    %13 = arith.truncf %12 : vector<16x256xf32> to vector<16x256xbf16>
    %c0_13 = arith.constant 0 : index
    %c0_14 = arith.constant 0 : index
    %14 = vector.load %arg4[%c0_13, %c0_14] : memref<256x256xbf16, #tpu.memory_space<vmem>>, vector<256x256xbf16>
    %cst_15 = arith.constant dense<0.000000e+00> : vector<16x256xf32>
    %15 = tpu.matmul %13, %14, %cst_15 {dimension_numbers = #tpu.dot_dimension_numbers<[1], [0], [0], [1], [0, 0, 1, 1], [], []>} : vector<16x256xbf16>, vector<256x256xbf16>, vector<16x256xf32> -> vector<16x256xf32>
    %c0_16 = arith.constant 0 : index
    %c0_17 = arith.constant 0 : index
    %16 = vector.load %arg5[%c0_16, %c0_17] : memref<1x256xf32, #tpu.memory_space<vmem>>, vector<1x256xf32>
    %17 = vector.broadcast %16 : vector<1x256xf32> to vector<16x256xf32>
    %18 = arith.addf %15, %17 : vector<16x256xf32>
    %cst_18 = arith.constant 0.000000e+00 : f32
    %19 = vector.broadcast %cst_18 : f32 to vector<16x256xf32>
    %20 = arith.maximumf %18, %19 : vector<16x256xf32>
    %21 = arith.truncf %20 : vector<16x256xf32> to vector<16x256xbf16>
    %c0_19 = arith.constant 0 : index
    %c0_20 = arith.constant 0 : index
    %22 = vector.load %arg6[%c0_19, %c0_20] : memref<256x128xbf16, #tpu.memory_space<vmem>>, vector<256x128xbf16>
    %cst_21 = arith.constant dense<0.000000e+00> : vector<16x128xf32>
    %23 = tpu.matmul %21, %22, %cst_21 {dimension_numbers = #tpu.dot_dimension_numbers<[1], [0], [0], [1], [0, 0, 1, 1], [], []>} : vector<16x256xbf16>, vector<256x128xbf16>, vector<16x128xf32> -> vector<16x128xf32>
    %c0_22 = arith.constant 0 : index
    %c0_23 = arith.constant 0 : index
    %24 = vector.load %arg7[%c0_22, %c0_23] : memref<1x128xf32, #tpu.memory_space<vmem>>, vector<1x128xf32>
    %25 = vector.broadcast %24 : vector<1x128xf32> to vector<16x128xf32>
    %26 = arith.addf %23, %25 : vector<16x128xf32>
    %27 = arith.truncf %26 : vector<16x128xf32> to vector<16x128xbf16>
    %c0_24 = arith.constant 0 : index
    %c0_25 = arith.constant 0 : index
    %28 = vector.load %arg8[%c0_24, %c0_25] : memref<16x128xbf16, #tpu.memory_space<vmem>>, vector<16x128xbf16>
    tpu.vector_store %arg8[%c0_24, %c0_25], %27 {strides = array<i32>} : memref<16x128xbf16, #tpu.memory_space<vmem>>, vector<16x128xbf16>,
    return
  }
  func.func @transform_0(%arg0: i32) -> (i32, i32) {
    %c0_i32 = arith.constant 0 : i32
    %c0_i32_0 = arith.constant 0 : i32
    return %arg0, %c0_i32 : i32, i32
  }
  func.func @transform_1(%arg0: i32) -> (i32, i32) {
    %c0_i32 = arith.constant 0 : i32
    %c0_i32_0 = arith.constant 0 : i32
    %c0_i32_1 = arith.constant 0 : i32
    return %c0_i32, %c0_i32_0 : i32, i32
  }
  func.func @transform_2(%arg0: i32) -> (i32, i32) {
    %c0_i32 = arith.constant 0 : i32
    %c0_i32_0 = arith.constant 0 : i32
    %c0_i32_1 = arith.constant 0 : i32
    return %c0_i32, %c0_i32_0 : i32, i32
  }
  func.func @transform_3(%arg0: i32) -> (i32, i32) {
    %c0_i32 = arith.constant 0 : i32
    %c0_i32_0 = arith.constant 0 : i32
    %c0_i32_1 = arith.constant 0 : i32
    return %c0_i32, %c0_i32_0 : i32, i32
  }
  func.func @transform_4(%arg0: i32) -> (i32, i32) {
    %c0_i32 = arith.constant 0 : i32
    %c0_i32_0 = arith.constant 0 : i32
    %c0_i32_1 = arith.constant 0 : i32
    return %c0_i32, %c0_i32_0 : i32, i32
  }
  func.func @transform_5(%arg0: i32) -> (i32, i32) {
    %c0_i32 = arith.constant 0 : i32
    %c0_i32_0 = arith.constant 0 : i32
    %c0_i32_1 = arith.constant 0 : i32
    return %c0_i32, %c0_i32_0 : i32, i32
  }
  func.func @transform_6(%arg0: i32) -> (i32, i32) {
    %c0_i32 = arith.constant 0 : i32
    %c0_i32_0 = arith.constant 0 : i32
    %c0_i32_1 = arith.constant 0 : i32
    return %c0_i32, %c0_i32_0 : i32, i32
  }
  func.func @transform_7(%arg0: i32) -> (i32, i32) {
    %c0_i32 = arith.constant 0 : i32
    %c0_i32_0 = arith.constant 0 : i32
    return %arg0, %c0_i32 : i32, i32
  }
}

</mosaic_0001>

<llo_original>
// kernel: tpu_custom_call.1
$region0: #{tpu_custom_call.1}
  #allocation0 [shape = 'u32[]', space=smem, size = 0x4, offset = 0x4, fixed_abs, tag = 'smem constant byte address 0x4 - core index']
  #allocation1 [shape = 'u32[144,128]{1,0:T(1,128)}', space=vmem, size = 0x12000, scoped, tag = 'internal scratch']
  #allocation2 [shape = 'f32[16,128]{1,0:T(8,128)}', space=vmem, size = 0x2000, scoped, tag = 'scratch operand']
  %s0 = inlined_call_operand.hbm [shape: f32[16,12], index: 0, kind: input, shape index: {}]
  %s1 = inlined_call_operand.hbm [shape: bf16[128,256], index: 1, kind: input, shape index: {}]
  %s2 = inlined_call_operand.vmem [shape: f32[1,256], index: 2, kind: input, shape index: {}]
  %s3 = inlined_call_operand.hbm [shape: bf16[256,256], index: 3, kind: input, shape index: {}]
  %s4 = inlined_call_operand.vmem [shape: f32[1,256], index: 4, kind: input, shape index: {}]
  %s5 = inlined_call_operand.hbm [shape: bf16[256,128], index: 5, kind: input, shape index: {}]
  %s6 = inlined_call_operand.vmem [shape: f32[1,128], index: 6, kind: input, shape index: {}]
  %s7 = inlined_call_operand.hbm [shape: bf16[16,128], index: 7, kind: output, shape index: {}]
  %s8 = sld [smem:[#allocation0]]
  $region54: #{tpu_custom_call.1} parent=0
    _
  %s10 = ssub.s32 1, %s8
  %s11 = scalar_select 0, %s10, %s8
  $region1: #{tpu_custom_call.1} parent=0
    #allocation3 [shape = 'u8[8192]{0}', space=vmem, size = 0x2000, scoped, tag = 'input window, operand 0, single buffered']
    #allocation4 [shape = 's32[1]{0}', space=sflag, size = 0x4, scoped, tag = 'scoped memory for tpu_custom_call.1']
    #allocation5 [shape = 's32[1]{0}', space=sflag, size = 0x4, scoped, tag = 'scoped memory for tpu_custom_call.1']
    #allocation6 [shape = 'u8[65536]{0}', space=vmem, size = 0x10000, scoped, tag = 'input window, operand 1, single buffered']
    #allocation7 [shape = 's32[1]{0}', space=sflag, size = 0x4, scoped, tag = 'scoped memory for tpu_custom_call.1']
    #allocation8 [shape = 'u8[131072]{0}', space=vmem, size = 0x20000, scoped, tag = 'input window, operand 3, single buffered']
    #allocation9 [shape = 'u8[65536]{0}', space=vmem, size = 0x10000, scoped, tag = 'input window, operand 5, single buffered']
    #allocation10 [shape = 's32[1]{0}', space=sflag, size = 0x4, scoped, tag = 'scoped memory for tpu_custom_call.1']
    #allocation11 [shape = 'u8[4096]{0}', space=vmem, size = 0x1000, scoped, tag = 'output window, operand 0, single buffered']
    %12 = vsyncpa [#allocation4], 0
    %13 = vsyncpa [#allocation7], 0
    %14 = vsyncpa [#allocation10], 0
    %15 = vsyncpa [#allocation5], 0
    // Predicated region
    $region2: #{tpu_custom_call.1} parent=1 // pred_check
      _
    $region3: #{tpu_custom_call.1} parent=1 // pred_check_branch
      %17 = sbr.rel (0) target = $region5
    $region4: #{tpu_custom_call.1} parent=1 // pred_region
      %s19 = ssub.s32 256, 256
      %20 = vsyncadd [#allocation4], %s19
      %s21 = sshll.u32 [#allocation3], 4
      %s22 = int_to_ptr.vmem [resolvable:$true] %s21
      %27 = dma.hbm_to_vmem [thread:$0]  %s0, 256, %s22, [#allocation4], 128, 128, 8
    $region5: #{tpu_custom_call.1} parent=1 // pred_fallthru
      _
    // Predicated region
    $region6: #{tpu_custom_call.1} parent=1 // pred_check
      _
    $region7: #{tpu_custom_call.1} parent=1 // pred_check_branch
      %29 = sbr.rel (0) target = $region9
    $region8: #{tpu_custom_call.1} parent=1 // pred_region
      %s31 = ssub.s32 2048, 2048
      %32 = vsyncadd [#allocation7], %s31
      %s33 = sshll.u32 [#allocation6], 4
      %s34 = int_to_ptr.vmem [resolvable:$true] %s33
      %39 = dma.hbm_to_vmem [thread:$0]  %s1, 2048, %s34, [#allocation7], 128, 128, 8
    $region9: #{tpu_custom_call.1} parent=1 // pred_fallthru
      _
    // Predicated region
    $region10: #{tpu_custom_call.1} parent=1 // pred_check
      _
    $region11: #{tpu_custom_call.1} parent=1 // pred_check_branch
      %41 = sbr.rel (0) target = $region13
    $region12: #{tpu_custom_call.1} parent=1 // pred_region
      _
    $region13: #{tpu_custom_call.1} parent=1 // pred_fallthru
      _
    // Predicated region
    $region14: #{tpu_custom_call.1} parent=1 // pred_check
      _
    $region15: #{tpu_custom_call.1} parent=1 // pred_check_branch
      %43 = sbr.rel (0) target = $region17
    $region16: #{tpu_custom_call.1} parent=1 // pred_region
      %s45 = ssub.s32 4096, 4096
      %46 = vsyncadd [#allocation7], %s45
      %s47 = sshll.u32 [#allocation8], 4
      %s48 = int_to_ptr.vmem [resolvable:$true] %s47
      %53 = dma.hbm_to_vmem [thread:$0]  %s3, 4096, %s48, [#allocation7], 128, 128, 8
    $region17: #{tpu_custom_call.1} parent=1 // pred_fallthru
      _
    // Predicated region
    $region18: #{tpu_custom_call.1} parent=1 // pred_check
      _
    $region19: #{tpu_custom_call.1} parent=1 // pred_check_branch
      %55 = sbr.rel (0) target = $region21
    $region20: #{tpu_custom_call.1} parent=1 // pred_region
      _
    $region21: #{tpu_custom_call.1} parent=1 // pred_fallthru
      _
    // Predicated region
    $region22: #{tpu_custom_call.1} parent=1 // pred_check
      _
    $region23: #{tpu_custom_call.1} parent=1 // pred_check_branch
      %57 = sbr.rel (0) target = $region25
    $region24: #{tpu_custom_call.1} parent=1 // pred_region
      %s59 = ssub.s32 2048, 2048
      %60 = vsyncadd [#allocation10], %s59
      %s61 = sshll.u32 [#allocation9], 4
      %s62 = int_to_ptr.vmem [resolvable:$true] %s61
      %67 = dma.hbm_to_vmem [thread:$0]  %s5, 2048, %s62, [#allocation10], 64, 64, 4
    $region25: #{tpu_custom_call.1} parent=1 // pred_fallthru
      _
    // Predicated region
    $region26: #{tpu_custom_call.1} parent=1 // pred_check
      _
    $region27: #{tpu_custom_call.1} parent=1 // pred_check_branch
      %69 = sbr.rel (0) target = $region29
    $region28: #{tpu_custom_call.1} parent=1 // pred_region
      _
    $region29: #{tpu_custom_call.1} parent=1 // pred_fallthru
      _
    // Predicated region
    $region30: #{tpu_custom_call.1} parent=1 // pred_check
      _
    $region31: #{tpu_custom_call.1} parent=1 // pred_check_branch
      %71 = sbr.rel (0) target = $region33
    $region32: #{tpu_custom_call.1} parent=1 // pred_region
      %72 = dma.done [#allocation4], 256
    $region33: #{tpu_custom_call.1} parent=1 // pred_fallthru
      _
    // Predicated region
    $region34: #{tpu_custom_call.1} parent=1 // pred_check
      _
    $region35: #{tpu_custom_call.1} parent=1 // pred_check_branch
      %74 = sbr.rel (0) target = $region37
    $region36: #{tpu_custom_call.1} parent=1 // pred_region
      %75 = dma.done [#allocation7], 2048
    $region37: #{tpu_custom_call.1} parent=1 // pred_fallthru
      _
    // Predicated region
    $region38: #{tpu_custom_call.1} parent=1 // pred_check
      _
    $region39: #{tpu_custom_call.1} parent=1 // pred_check_branch
      %77 = sbr.rel (0) target = $region41
    $region40: #{tpu_custom_call.1} parent=1 // pred_region
      %78 = dma.done [#allocation7], 4096
    $region41: #{tpu_custom_call.1} parent=1 // pred_fallthru
      _
    // Predicated region
    $region42: #{tpu_custom_call.1} parent=1 // pred_check
      _
    $region43: #{tpu_custom_call.1} parent=1 // pred_check_branch
      %80 = sbr.rel (0) target = $region45
    $region44: #{tpu_custom_call.1} parent=1 // pred_region
      %81 = dma.done [#allocation10], 2048
    $region45: #{tpu_custom_call.1} parent=1 // pred_fallthru
      _
    %83 = vst [vmem:[#allocation2] sm:$0xff] 0.0
    %84 = vst [vmem:[#allocation2 + $0x8] sm:$0xff] 0.0
    %v85 = vld [vmem:[#allocation3] sm:$0xff]
    %v86 = vld [vmem:[#allocation3 + $0x8] sm:$0xff]
    %vm87 = vcmask 97280
    %88 = vst.msk [vmem:[#allocation2] sm:$0xff] %vm87, %v85
    %89 = vst.msk [vmem:[#allocation2 + $0x8] sm:$0xff] %vm87, %v86
    %v90 = vld [vmem:[#allocation2] sm:$0xff]
    %v91 = vld [vmem:[#allocation2 + $0x8] sm:$0xff]
    %v92 = vpack.c.bf16 %v91, %v90
    %v93 = vld [vmem:[#allocation6] sm:$0xff]
    %v94 = vld [vmem:[#allocation6 + $0x8] sm:$0xff]
    %v95 = vld [vmem:[#allocation6 + $0x10] sm:$0xff]
    %v96 = vld [vmem:[#allocation6 + $0x18] sm:$0xff]
    %v97 = vld [vmem:[#allocation6 + $0x20] sm:$0xff]
    %v98 = vld [vmem:[#allocation6 + $0x28] sm:$0xff]
    %v99 = vld [vmem:[#allocation6 + $0x30] sm:$0xff]
    %v100 = vld [vmem:[#allocation6 + $0x38] sm:$0xff]
    %v101 = vld [vmem:[#allocation6 + $0x40] sm:$0xff]
    %v102 = vld [vmem:[#allocation6 + $0x48] sm:$0xff]
    %v103 = vld [vmem:[#allocation6 + $0x50] sm:$0xff]
    %v104 = vld [vmem:[#allocation6 + $0x58] sm:$0xff]
    %v105 = vld [vmem:[#allocation6 + $0x60] sm:$0xff]
    %v106 = vld [vmem:[#allocation6 + $0x68] sm:$0xff]
    %v107 = vld [vmem:[#allocation6 + $0x70] sm:$0xff]
    %v108 = vld [vmem:[#allocation6 + $0x78] sm:$0xff]
    %v109 = vld [vmem:[%s2] sm:$0x3]
    %v111 = vlaneseq
    %v112 = vshrl.u32 %v111, 7
    %v113 = vsub.s32 0, %v112
    %v114 = vrot.slane %v109, %v113
    %v115 = vlaneseq
    %v116 = vshrl.u32 %v115, 7
    %v117 = vsub.s32 1, %v116
    %v118 = vrot.slane %v109, %v117
    %v137 = vunpack.c.l.b16 %v93
    %v138 = vunpack.c.h.b16 %v93
    %v139 = vunpack.c.l.b16 %v94
    %v140 = vunpack.c.h.b16 %v94
    %v141 = vunpack.c.l.b16 %v95
    %v142 = vunpack.c.h.b16 %v95
    %v143 = vunpack.c.l.b16 %v96
    %v144 = vunpack.c.h.b16 %v96
    %v145 = vunpack.c.l.b16 %v97
    %v146 = vunpack.c.h.b16 %v97
    %v147 = vunpack.c.l.b16 %v98
    %v148 = vunpack.c.h.b16 %v98
    %v149 = vunpack.c.l.b16 %v99
    %v150 = vunpack.c.h.b16 %v99
    %v151 = vunpack.c.l.b16 %v100
    %v152 = vunpack.c.h.b16 %v100
    %v153 = vunpack.c.l.b16 %v101
    %v154 = vunpack.c.h.b16 %v101
    %v155 = vunpack.c.l.b16 %v102
    %v156 = vunpack.c.h.b16 %v102
    %v157 = vunpack.c.l.b16 %v103
    %v158 = vunpack.c.h.b16 %v103
    %v159 = vunpack.c.l.b16 %v104
    %v160 = vunpack.c.h.b16 %v104
    %v161 = vunpack.c.l.b16 %v105
    %v162 = vunpack.c.h.b16 %v105
    %v163 = vunpack.c.l.b16 %v106
    %v164 = vunpack.c.h.b16 %v106
    %v165 = vunpack.c.l.b16 %v107
    %v166 = vunpack.c.h.b16 %v107
    %v167 = vunpack.c.l.b16 %v108
    %v168 = vunpack.c.h.b16 %v108
    %v169 = vpack.c.b16 %v139, %v137
    %v170 = vpack.c.b16 %v140, %v138
    %v171 = vpack.c.b16 %v143, %v141
    %v172 = vpack.c.b16 %v144, %v142
    %v173 = vpack.c.b16 %v147, %v145
    %v174 = vpack.c.b16 %v148, %v146
    %v175 = vpack.c.b16 %v151, %v149
    %v176 = vpack.c.b16 %v152, %v150
    %v177 = vpack.c.b16 %v155, %v153
    %v178 = vpack.c.b16 %v156, %v154
    %v179 = vpack.c.b16 %v159, %v157
    %v180 = vpack.c.b16 %v160, %v158
    %v181 = vpack.c.b16 %v163, %v161
    %v182 = vpack.c.b16 %v164, %v162
    %v183 = vpack.c.b16 %v167, %v165
    %v184 = vpack.c.b16 %v168, %v166
    %201 = vmatprep.subr.bf16.mxu0 %v170
    %202 = vmatpush1.bf16.msra.mxu0 %v169
    %203 = vmatprep.subr.bf16.mxu0 %v172
    %204 = vmatpush1.bf16.msra.mxu0 %v171
    %205 = vmatprep.subr.bf16.mxu0 %v174
    %206 = vmatpush1.bf16.msra.mxu0 %v173
    %207 = vmatprep.subr.bf16.mxu0 %v176
    %208 = vmatpush1.bf16.msra.mxu0 %v175
    %209 = vmatprep.subr.bf16.mxu0 %v178
    %210 = vmatpush1.bf16.msra.mxu0 %v177
    %211 = vmatprep.subr.bf16.mxu0 %v180
    %212 = vmatpush1.bf16.msra.mxu0 %v179
    %213 = vmatprep.subr.bf16.mxu0 %v182
    %214 = vmatpush1.bf16.msra.mxu0 %v181
    %215 = vmatprep.subr.bf16.mxu0 %v184
    %216 = vmatpush1.bf16.msra.mxu0 %v183
    %217 = vmatprep.subr.bf16.mxu0 0
    %218 = vmatpush1.bf16.msra.mxu0 0
    %219 = vmatprep.subr.bf16.mxu0 0
    %220 = vmatpush1.bf16.msra.mxu0 0
    %221 = vmatprep.subr.bf16.mxu0 0
    %222 = vmatpush1.bf16.msra.mxu0 0
    %223 = vmatprep.subr.bf16.mxu0 0
    %224 = vmatpush1.bf16.msra.mxu0 0
    %225 = vmatprep.subr.bf16.mxu0 0
    %226 = vmatpush1.bf16.msra.mxu0 0
    %227 = vmatprep.subr.bf16.mxu0 0
    %228 = vmatpush1.bf16.msra.mxu0 0
    %229 = vmatprep.subr.bf16.mxu0 0
    %230 = vmatpush1.bf16.msra.mxu0 0
    %231 = vmatprep.subr.bf16.mxu0 0
    %232 = vmatpush1.bf16.msra.mxu0 0
    %233 = vmatprep.mubr.bf16.mxu0 0
    %234 = vmatmul.mubr.bf16.gmra.mrb[0].mxu0 %v92
    %v235 = vpop.f32.mrb[0].mxu0
    %v236 = vadd.f32 %v114, %v235
    %v237 = vpop.f32.mrb[0].mxu0
    %v238 = vadd.f32 %v118, %v237
    %v239 = vpop.f32.mrb[0].mxu0
    %v240 = vadd.f32 %v114, %v239
    %v241 = vpop.f32.mrb[0].mxu0
    %v242 = vadd.f32 %v118, %v241
    %243 = vdwg.mxu0
    %v244 = vmax.f32 %v236, 0.0
    %v245 = vmax.f32 %v238, 0.0
    %v246 = vmax.f32 %v240, 0.0
    %v247 = vmax.f32 %v242, 0.0
    %v248 = vpack.c.bf16 %v246, %v244
    %v249 = vpack.c.bf16 %v247, %v245
    %v250 = vld [vmem:[#allocation8] sm:$0xff]
    %v251 = vld [vmem:[#allocation8 + $0x8] sm:$0xff]
    %v252 = vld [vmem:[#allocation8 + $0x10] sm:$0xff]
    %v253 = vld [vmem:[#allocation8 + $0x18] sm:$0xff]
    %v254 = vld [vmem:[#allocation8 + $0x20] sm:$0xff]
    %v255 = vld [vmem:[#allocation8 + $0x28] sm:$0xff]
    %v256 = vld [vmem:[#allocation8 + $0x30] sm:$0xff]
    %v257 = vld [vmem:[#allocation8 + $0x38] sm:$0xff]
    %v258 = vld [vmem:[#allocation8 + $0x40] sm:$0xff]
    %v259 = vld [vmem:[#allocation8 + $0x48] sm:$0xff]
    %v260 = vld [vmem:[#allocation8 + $0x50] sm:$0xff]
    %v261 = vld [vmem:[#allocation8 + $0x58] sm:$0xff]
    %v262 = vld [vmem:[#allocation8 + $0x60] sm:$0xff]
    %v263 = vld [vmem:[#allocation8 + $0x68] sm:$0xff]
    %v264 = vld [vmem:[#allocation8 + $0x70] sm:$0xff]
    %v265 = vld [vmem:[#allocation8 + $0x78] sm:$0xff]
    %v266 = vld [vmem:[#allocation8 + $0x80] sm:$0xff]
    %v267 = vld [vmem:[#allocation8 + $0x88] sm:$0xff]
    %v268 = vld [vmem:[#allocation8 + $0x90] sm:$0xff]
    %v269 = vld [vmem:[#allocation8 + $0x98] sm:$0xff]
    %v270 = vld [vmem:[#allocation8 + $0xa0] sm:$0xff]
    %v271 = vld [vmem:[#allocation8 + $0xa8] sm:$0xff]
    %v272 = vld [vmem:[#allocation8 + $0xb0] sm:$0xff]
    %v273 = vld [vmem:[#allocation8 + $0xb8] sm:$0xff]
    %v274 = vld [vmem:[#allocation8 + $0xc0] sm:$0xff]
    %v275 = vld [vmem:[#allocation8 + $0xc8] sm:$0xff]
    %v276 = vld [vmem:[#allocation8 + $0xd0] sm:$0xff]
    %v277 = vld [vmem:[#allocation8 + $0xd8] sm:$0xff]
    %v278 = vld [vmem:[#allocation8 + $0xe0] sm:$0xff]
    %v279 = vld [vmem:[#allocation8 + $0xe8] sm:$0xff]
    %v280 = vld [vmem:[#allocation8 + $0xf0] sm:$0xff]
    %v281 = vld [vmem:[#allocation8 + $0xf8] sm:$0xff]
    %v282 = vld [vmem:[%s4] sm:$0x3]
    %v284 = vlaneseq
    %v285 = vshrl.u32 %v284, 7
    %v286 = vsub.s32 0, %v285
    %v287 = vrot.slane %v282, %v286
    %v288 = vlaneseq
    %v289 = vshrl.u32 %v288, 7
    %v290 = vsub.s32 1, %v289
    %v291 = vrot.slane %v282, %v290
    %v326 = vunpack.c.l.b16 %v250
    %v327 = vunpack.c.h.b16 %v250
    %v328 = vunpack.c.l.b16 %v251
    %v329 = vunpack.c.h.b16 %v251
    %v330 = vunpack.c.l.b16 %v252
    %v331 = vunpack.c.h.b16 %v252
    %v332 = vunpack.c.l.b16 %v253
    %v333 = vunpack.c.h.b16 %v253
    %v334 = vunpack.c.l.b16 %v254
    %v335 = vunpack.c.h.b16 %v254
    %v336 = vunpack.c.l.b16 %v255
    %v337 = vunpack.c.h.b16 %v255
    %v338 = vunpack.c.l.b16 %v256
    %v339 = vunpack.c.h.b16 %v256
    %v340 = vunpack.c.l.b16 %v257
    %v341 = vunpack.c.h.b16 %v257
    %v342 = vunpack.c.l.b16 %v258
    %v343 = vunpack.c.h.b16 %v258
    %v344 = vunpack.c.l.b16 %v259
    %v345 = vunpack.c.h.b16 %v259
    %v346 = vunpack.c.l.b16 %v260
    %v347 = vunpack.c.h.b16 %v260
    %v348 = vunpack.c.l.b16 %v261
    %v349 = vunpack.c.h.b16 %v261
    %v350 = vunpack.c.l.b16 %v262
    %v351 = vunpack.c.h.b16 %v262
    %v352 = vunpack.c.l.b16 %v263
    %v353 = vunpack.c.h.b16 %v263
    %v354 = vunpack.c.l.b16 %v264
    %v355 = vunpack.c.h.b16 %v264
    %v356 = vunpack.c.l.b16 %v265
    %v357 = vunpack.c.h.b16 %v265
    %v358 = vunpack.c.l.b16 %v266
    %v359 = vunpack.c.h.b16 %v266
    %v360 = vunpack.c.l.b16 %v267
    %v361 = vunpack.c.h.b16 %v267
    %v362 = vunpack.c.l.b16 %v268
    %v363 = vunpack.c.h.b16 %v268
    %v364 = vunpack.c.l.b16 %v269
    %v365 = vunpack.c.h.b16 %v269
    %v366 = vunpack.c.l.b16 %v270
    %v367 = vunpack.c.h.b16 %v270
    %v368 = vunpack.c.l.b16 %v271
    %v369 = vunpack.c.h.b16 %v271
    %v370 = vunpack.c.l.b16 %v272
    %v371 = vunpack.c.h.b16 %v272
    %v372 = vunpack.c.l.b16 %v273
    %v373 = vunpack.c.h.b16 %v273
    %v374 = vunpack.c.l.b16 %v274
    %v375 = vunpack.c.h.b16 %v274
    %v376 = vunpack.c.l.b16 %v275
    %v377 = vunpack.c.h.b16 %v275
    %v378 = vunpack.c.l.b16 %v276
    %v379 = vunpack.c.h.b16 %v276
    %v380 = vunpack.c.l.b16 %v277
    %v381 = vunpack.c.h.b16 %v277
    %v382 = vunpack.c.l.b16 %v278
    %v383 = vunpack.c.h.b16 %v278
    %v384 = vunpack.c.l.b16 %v279
    %v385 = vunpack.c.h.b16 %v279
    %v386 = vunpack.c.l.b16 %v280
    %v387 = vunpack.c.h.b16 %v280
    %v388 = vunpack.c.l.b16 %v281
    %v389 = vunpack.c.h.b16 %v281
    %v390 = vpack.c.b16 %v328, %v326
    %v391 = vpack.c.b16 %v329, %v327
    %v392 = vpack.c.b16 %v332, %v330
    %v393 = vpack.c.b16 %v333, %v331
    %v394 = vpack.c.b16 %v336, %v334
    %v395 = vpack.c.b16 %v337, %v335
    %v396 = vpack.c.b16 %v340, %v338
    %v397 = vpack.c.b16 %v341, %v339
    %v398 = vpack.c.b16 %v344, %v342
    %v399 = vpack.c.b16 %v345, %v343
    %v400 = vpack.c.b16 %v348, %v346
    %v401 = vpack.c.b16 %v349, %v347
    %v402 = vpack.c.b16 %v352, %v350
    %v403 = vpack.c.b16 %v353, %v351
    %v404 = vpack.c.b16 %v356, %v354
    %v405 = vpack.c.b16 %v357, %v355
    %v406 = vpack.c.b16 %v360, %v358
    %v407 = vpack.c.b16 %v361, %v359
    %v408 = vpack.c.b16 %v364, %v362
    %v409 = vpack.c.b16 %v365, %v363
    %v410 = vpack.c.b16 %v368, %v366
    %v411 = vpack.c.b16 %v369, %v367
    %v412 = vpack.c.b16 %v372, %v370
    %v413 = vpack.c.b16 %v373, %v371
    %v414 = vpack.c.b16 %v376, %v374
    %v415 = vpack.c.b16 %v377, %v375
    %v416 = vpack.c.b16 %v380, %v378
    %v417 = vpack.c.b16 %v381, %v379
    %v418 = vpack.c.b16 %v384, %v382
    %v419 = vpack.c.b16 %v385, %v383
    %v420 = vpack.c.b16 %v388, %v386
    %v421 = vpack.c.b16 %v389, %v387
    %454 = vmatprep.subr.bf16.mxu0 %v391
    %455 = vmatpush1.bf16.msra.mxu0 %v390
    %456 = vmatprep.subr.bf16.mxu0 %v393
    %457 = vmatpush1.bf16.msra.mxu0 %v392
    %458 = vmatprep.subr.bf16.mxu0 %v395
    %459 = vmatpush1.bf16.msra.mxu0 %v394
    %460 = vmatprep.subr.bf16.mxu0 %v397
    %461 = vmatpush1.bf16.msra.mxu0 %v396
    %462 = vmatprep.subr.bf16.mxu0 %v399
    %463 = vmatpush1.bf16.msra.mxu0 %v398
    %464 = vmatprep.subr.bf16.mxu0 %v401
    %465 = vmatpush1.bf16.msra.mxu0 %v400
    %466 = vmatprep.subr.bf16.mxu0 %v403
    %467 = vmatpush1.bf16.msra.mxu0 %v402
    %468 = vmatprep.subr.bf16.mxu0 %v405
    %469 = vmatpush1.bf16.msra.mxu0 %v404
    %470 = vmatprep.subr.bf16.mxu0 %v407
    %471 = vmatpush1.bf16.msra.mxu0 %v406
    %472 = vmatprep.subr.bf16.mxu0 %v409
    %473 = vmatpush1.bf16.msra.mxu0 %v408
    %474 = vmatprep.subr.bf16.mxu0 %v411
    %475 = vmatpush1.bf16.msra.mxu0 %v410
    %476 = vmatprep.subr.bf16.mxu0 %v413
    %477 = vmatpush1.bf16.msra.mxu0 %v412
    %478 = vmatprep.subr.bf16.mxu0 %v415
    %479 = vmatpush1.bf16.msra.mxu0 %v414
    %480 = vmatprep.subr.bf16.mxu0 %v417
    %481 = vmatpush1.bf16.msra.mxu0 %v416
    %482 = vmatprep.subr.bf16.mxu0 %v419
    %483 = vmatpush1.bf16.msra.mxu0 %v418
    %484 = vmatprep.subr.bf16.mxu0 %v421
    %485 = vmatpush1.bf16.msra.mxu0 %v420
    %486 = vmatprep.mubr.bf16.mxu0 %v249
    %487 = vmatmul.mubr.bf16.gmra.mrb[0].mxu0 %v248
    %v488 = vpop.f32.mrb[0].mxu0
    %v489 = vadd.f32 %v287, %v488
    %v490 = vpop.f32.mrb[0].mxu0
    %v491 = vadd.f32 %v291, %v490
    %v492 = vpop.f32.mrb[0].mxu0
    %v493 = vadd.f32 %v287, %v492
    %v494 = vpop.f32.mrb[0].mxu0
    %v495 = vadd.f32 %v291, %v494
    %496 = vdwg.mxu0
    %v497 = vmax.f32 %v489, 0.0
    %v498 = vmax.f32 %v491, 0.0
    %v499 = vmax.f32 %v493, 0.0
    %v500 = vmax.f32 %v495, 0.0
    %v501 = vpack.c.bf16 %v499, %v497
    %v502 = vpack.c.bf16 %v500, %v498
    %v503 = vld [vmem:[#allocation9] sm:$0xf]
    %v504 = vld [vmem:[#allocation9 + $0x4] sm:$0xf]
    %v505 = vld [vmem:[#allocation9 + $0x8] sm:$0xf]
    %v506 = vld [vmem:[#allocation9 + $0xc] sm:$0xf]
    %v507 = vld [vmem:[#allocation9 + $0x10] sm:$0xf]
    %v508 = vld [vmem:[#allocation9 + $0x14] sm:$0xf]
    %v509 = vld [vmem:[#allocation9 + $0x18] sm:$0xf]
    %v510 = vld [vmem:[#allocation9 + $0x1c] sm:$0xf]
    %v511 = vld [vmem:[#allocation9 + $0x20] sm:$0xf]
    %v512 = vld [vmem:[#allocation9 + $0x24] sm:$0xf]
    %v513 = vld [vmem:[#allocation9 + $0x28] sm:$0xf]
    %v514 = vld [vmem:[#allocation9 + $0x2c] sm:$0xf]
    %v515 = vld [vmem:[#allocation9 + $0x30] sm:$0xf]
    %v516 = vld [vmem:[#allocation9 + $0x34] sm:$0xf]
    %v517 = vld [vmem:[#allocation9 + $0x38] sm:$0xf]
    %v518 = vld [vmem:[#allocation9 + $0x3c] sm:$0xf]
    %v519 = vld [vmem:[#allocation9 + $0x40] sm:$0xf]
    %v520 = vld [vmem:[#allocation9 + $0x44] sm:$0xf]
    %v521 = vld [vmem:[#allocation9 + $0x48] sm:$0xf]
    %v522 = vld [vmem:[#allocation9 + $0x4c] sm:$0xf]
    %v523 = vld [vmem:[#allocation9 + $0x50] sm:$0xf]
    %v524 = vld [vmem:[#allocation9 + $0x54] sm:$0xf]
    %v525 = vld [vmem:[#allocation9 + $0x58] sm:$0xf]
    %v526 = vld [vmem:[#allocation9 + $0x5c] sm:$0xf]
    %v527 = vld [vmem:[#allocation9 + $0x60] sm:$0xf]
    %v528 = vld [vmem:[#allocation9 + $0x64] sm:$0xf]
    %v529 = vld [vmem:[#allocation9 + $0x68] sm:$0xf]
    %v530 = vld [vmem:[#allocation9 + $0x6c] sm:$0xf]
    %v531 = vld [vmem:[#allocation9 + $0x70] sm:$0xf]
    %v532 = vld [vmem:[#allocation9 + $0x74] sm:$0xf]
    %v533 = vld [vmem:[#allocation9 + $0x78] sm:$0xf]
    %v534 = vld [vmem:[#allocation9 + $0x7c] sm:$0xf]
    %v535 = vld [vmem:[%s6] sm:$0x1]
    %v537 = vlaneseq
    %v538 = vshrl.u32 %v537, 7
    %v539 = vsub.s32 0, %v538
    %v540 = vrot.slane %v535, %v539
    %v574 = vunpack.c.l.b16 %v503
    %v575 = vunpack.c.l.b16 %v504
    %v576 = vunpack.c.l.b16 %v505
    %v577 = vunpack.c.l.b16 %v506
    %v578 = vunpack.c.l.b16 %v507
    %v579 = vunpack.c.l.b16 %v508
    %v580 = vunpack.c.l.b16 %v509
    %v581 = vunpack.c.l.b16 %v510
    %v582 = vunpack.c.l.b16 %v511
    %v583 = vunpack.c.l.b16 %v512
    %v584 = vunpack.c.l.b16 %v513
    %v585 = vunpack.c.l.b16 %v514
    %v586 = vunpack.c.l.b16 %v515
    %v587 = vunpack.c.l.b16 %v516
    %v588 = vunpack.c.l.b16 %v517
    %v589 = vunpack.c.l.b16 %v518
    %v590 = vunpack.c.l.b16 %v519
    %v591 = vunpack.c.l.b16 %v520
    %v592 = vunpack.c.l.b16 %v521
    %v593 = vunpack.c.l.b16 %v522
    %v594 = vunpack.c.l.b16 %v523
    %v595 = vunpack.c.l.b16 %v524
    %v596 = vunpack.c.l.b16 %v525
    %v597 = vunpack.c.l.b16 %v526
    %v598 = vunpack.c.l.b16 %v527
    %v599 = vunpack.c.l.b16 %v528
    %v600 = vunpack.c.l.b16 %v529
    %v601 = vunpack.c.l.b16 %v530
    %v602 = vunpack.c.l.b16 %v531
    %v603 = vunpack.c.l.b16 %v532
    %v604 = vunpack.c.l.b16 %v533
    %v605 = vunpack.c.l.b16 %v534
    %v606 = vpack.c.b16 %v575, %v574
    %v607 = vpack.c.b16 %v577, %v576
    %v608 = vpack.c.b16 %v579, %v578
    %v609 = vpack.c.b16 %v581, %v580
    %v610 = vpack.c.b16 %v583, %v582
    %v611 = vpack.c.b16 %v585, %v584
    %v612 = vpack.c.b16 %v587, %v586
    %v613 = vpack.c.b16 %v589, %v588
    %v614 = vpack.c.b16 %v591, %v590
    %v615 = vpack.c.b16 %v593, %v592
    %v616 = vpack.c.b16 %v595, %v594
    %v617 = vpack.c.b16 %v597, %v596
    %v618 = vpack.c.b16 %v599, %v598
    %v619 = vpack.c.b16 %v601, %v600
    %v620 = vpack.c.b16 %v603, %v602
    %v621 = vpack.c.b16 %v605, %v604
    %638 = vmatprep.subr.bf16.mxu0 0
    %639 = vmatpush1.bf16.msra.mxu0 %v606
    %640 = vmatprep.subr.bf16.mxu0 0
    %641 = vmatpush1.bf16.msra.mxu0 %v607
    %642 = vmatprep.subr.bf16.mxu0 0
    %643 = vmatpush1.bf16.msra.mxu0 %v608
    %644 = vmatprep.subr.bf16.mxu0 0
    %645 = vmatpush1.bf16.msra.mxu0 %v609
    %646 = vmatprep.subr.bf16.mxu0 0
    %647 = vmatpush1.bf16.msra.mxu0 %v610
    %648 = vmatprep.subr.bf16.mxu0 0
    %649 = vmatpush1.bf16.msra.mxu0 %v611
    %650 = vmatprep.subr.bf16.mxu0 0
    %651 = vmatpush1.bf16.msra.mxu0 %v612
    %652 = vmatprep.subr.bf16.mxu0 0
    %653 = vmatpush1.bf16.msra.mxu0 %v613
    %654 = vmatprep.subr.bf16.mxu0 0
    %655 = vmatpush1.bf16.msra.mxu0 %v614
    %656 = vmatprep.subr.bf16.mxu0 0
    %657 = vmatpush1.bf16.msra.mxu0 %v615
    %658 = vmatprep.subr.bf16.mxu0 0
    %659 = vmatpush1.bf16.msra.mxu0 %v616
    %660 = vmatprep.subr.bf16.mxu0 0
    %661 = vmatpush1.bf16.msra.mxu0 %v617
    %662 = vmatprep.subr.bf16.mxu0 0
    %663 = vmatpush1.bf16.msra.mxu0 %v618
    %664 = vmatprep.subr.bf16.mxu0 0
    %665 = vmatpush1.bf16.msra.mxu0 %v619
    %666 = vmatprep.subr.bf16.mxu0 0
    %667 = vmatpush1.bf16.msra.mxu0 %v620
    %668 = vmatprep.subr.bf16.mxu0 0
    %669 = vmatpush1.bf16.msra.mxu0 %v621
    %670 = vmatprep.mubr.bf16.mxu0 %v502
    %671 = vmatmul.mubr.bf16.gmra.mrb[0].mxu0 %v501
    %v672 = vpop.f32.mrb[0].mxu0
    %v673 = vadd.f32 %v540, %v672
    %v674 = vpop.f32.mrb[0].mxu0
    %v675 = vpop.f32.mrb[0].mxu0
    %v676 = vadd.f32 %v540, %v675
    %v677 = vpop.f32.mrb[0].mxu0
    %678 = vdwg.mxu0
    %v679 = vpack.c.bf16 %v676, %v673
    %v681 = vunpack.c.l.b16 %v679
    %v682 = vunpack.c.h.b16 %v679
    %v683 = vpack.c.b16 %v681, %v681
    %v684 = vpack.c.b16 %v682, %v682
    %687 = vst [vmem:[#allocation11] sm:$0xf] %v683
    %688 = vst [vmem:[#allocation11 + $0x4] sm:$0xf] %v684
    // Predicated region
    $region46: #{tpu_custom_call.1} parent=1 // pred_check
      _
    $region47: #{tpu_custom_call.1} parent=1 // pred_check_branch
      %690 = sbr.rel (0) target = $region49
    $region48: #{tpu_custom_call.1} parent=1 // pred_region
      %s692 = ssub.s32 128, 128
      %693 = vsyncadd [#allocation5], %s692
      %s694 = sshll.u32 [#allocation11], 4
      %s695 = int_to_ptr.vmem [resolvable:$true] %s694
      %700 = dma.vmem_to_hbm [thread:$0]  %s695, 128, %s7, [#allocation5], 64, 64, 4
    $region49: #{tpu_custom_call.1} parent=1 // pred_fallthru
      _
    // Predicated region
    $region50: #{tpu_custom_call.1} parent=1 // pred_check
      _
    $region51: #{tpu_custom_call.1} parent=1 // pred_check_branch
      %702 = sbr.rel (0) target = $region53
    $region52: #{tpu_custom_call.1} parent=1 // pred_region
      %703 = dma.done [#allocation5], 128
    $region53: #{tpu_custom_call.1} parent=1 // pred_fallthru
      _
    %704 = vsyncpa [#allocation4], 1
    %705 = vsyncpa [#allocation7], 1
    %706 = vsyncpa [#allocation10], 1
    %707 = vsyncpa [#allocation5], 1

</llo_original>
